<compile_context>
chip_gen: v5e
topology: v5e:2x2
jax: 0.10.0
libtpu: 0.0.40
codegen_flags: <defaults>
</compile_context>

<pallas_src>
import functools

import jax
import jax.numpy as jnp
from jax.experimental import pallas as pl
from jax.experimental.pallas import tpu as pltpu

# find_ab_params(spread=1.0, min_dist=0.1): standard UMAP curve-fit result,
# hardcoded deterministically (no scipy needed).
# TODO(synk): find_ab_params uses scipy.optimize.curve_fit in the original; the
# fitted constants for the default (1.0, 0.1) are inlined here.
_A = 1.5769434603113077
_B = 0.8950608781227859
_EPS = 1e-4
_LANES = 128
_SUBLANES = 8
_MIN_BLOCK = _SUBLANES * _LANES  # 1024 = smallest dense (8,128) tile of pairs


def _round_up(x, m):
    return -(-x // m) * m


def _umap_ce_kernel(to_ref, from_ref, ce_ref, *, a, b, repulsion_strength,
                    batch_size, num_pairs, block_sublanes, dim):
    """One grid step processes S*128 row-pairs.

    to_ref, from_ref : (D, S, 128) pair endpoints (feature dim leading),
                       stream dtype (bf16 or f32), cast to f32 on load.
    ce_ref           : (S, 128)   per-pair cross-entropy (0 for padded pairs).
    """
    i = pl.program_id(0)
    S = block_sublanes

    # Streaming squared-distance reduction over D: never materializes the
    # (D, S, 128) diff tensor; per-iteration live set is a handful of vregs.
    def accum(d, acc):
        t = to_ref[d].astype(jnp.float32)          # (S, 128)
        f = from_ref[d].astype(jnp.float32)
        diff = t - f
        return acc + diff * diff

    sq = jax.lax.fori_loop(0, dim, accum,
                           jnp.zeros((S, _LANES), jnp.float32),
                           unroll=True)            # ||to - from||^2, (S, 128)

    # torch: d ** (2*b) == (d^2) ** b.  Guard sq == 0 (identical rows): yields
    # ~1.6e-27 instead of exactly 0, which rounds to prob_dist == 1.0 in f32,
    # matching the reference after the EPS clip.
    pow_val = jnp.exp(b * jnp.log(jnp.maximum(sq, 1e-30)))
    prob_dist = 1.0 / (1.0 + a * pow_val)          # (S, 128)

    # Global pair index of every element in the tile (row-major over (S,128)).
    col = (i * (S * _LANES)
           + jax.lax.broadcasted_iota(jnp.int32, (S, _LANES), 0) * _LANES
           + jax.lax.broadcasted_iota(jnp.int32, (S, _LANES), 1))
    is_pos = col < batch_size                      # probabilities_graph == 1
    valid = col < num_pairs                        # mask padded pairs

    # Fused CE: probabilities_graph is exactly {0,1}, so the attraction and
    # repellent terms are complementary -> one select + one log.
    log_arg = jnp.where(is_pos,
                        jnp.clip(prob_dist, _EPS, 1.0),
                        jnp.clip(1.0 - prob_dist, _EPS, 1.0))
    weight = jnp.where(is_pos,
                       jnp.float32(1.0),
                       jnp.float32(repulsion_strength))
    ce = -weight * jnp.log(log_arg)
    ce_ref[...] = jnp.where(valid, ce, 0.0)


def umap_loss(embedding_to, embedding_from, perm_key, *,
              negative_sample_rate=5, repulsion_strength=1.0,
              a=_A, b=_B, block_cols=16384, stream_dtype=jnp.bfloat16,
              vmem_budget_bytes=12 * 1024 * 1024):
    """Pallas implementation of UMAPLoss.forward.

    embedding_to / embedding_from: (B, D); B plays the role of
    self.batch_size in the PyTorch module.
    """
    B, D = embedding_to.shape
    nsr = negative_sample_rate
    N = B * (1 + nsr)                               # total pair count

    # ---- tile-size selection -------------------------------------------
    # Cap the double-buffered input footprint (2 inputs x 2 buffers) at
    # vmem_budget_bytes so we stay inside every generation's scoped VMEM
    # default (v5e: 16 MiB, v6e/v7x: 32 MiB scoped, v7x: 64 MiB physical).
    elem = jnp.dtype(stream_dtype).itemsize
    max_block = (vmem_budget_bytes // (4 * D * elem)) // _MIN_BLOCK * _MIN_BLOCK
    target = max(_MIN_BLOCK, min(_round_up(block_cols, _MIN_BLOCK), max_block))

    # Avoid gross padding for small/medium N: pick the number of blocks for
    # the target size, then shrink the block to the smallest 1024-multiple
    # that still covers N (padding is always < 1024 pairs per block).
    nb = -(-N // target)                            # ceil(N / target)
    block = _round_up(-(-N // nb), _MIN_BLOCK)      # <= target, multiple of 1024
    S = block // _LANES                             # sublane rows per tile
    Np = nb * block                                 # padded pair count

    # ---- negative sampling by pure index arithmetic ---------------------
    # Negative row r uses:
    #   to   = embedding_to[r // nsr]           (repeat_interleave)
    #   from = embedding_from[perm[r] // nsr]   (repeat_interleave then randperm)
    # TODO(synk): torch.randperm is replaced by jax.random.permutation with an
    # explicit key (same distribution, different RNG stream than PyTorch).
    pos_idx = jnp.arange(B, dtype=jnp.int32)
    perm = jax.random.permutation(perm_key, B * nsr).astype(jnp.int32)
    to_idx = jnp.concatenate([pos_idx, jnp.repeat(pos_idx, nsr)])
    from_idx = jnp.concatenate([pos_idx, perm // nsr])
    pad = Np - N
    to_idx = jnp.pad(to_idx, (0, pad))      # pad with a valid index; masked in-kernel
    from_idx = jnp.pad(from_idx, (0, pad))

    # Single gather per side from the tiny (D, B) table, in the streaming
    # dtype (bf16 by default -> halves both the gather-write and the kernel
    # read HBM bytes).  Feature dim stays leading so no large transpose of
    # the gathered data is ever materialized; the kernel's per-step DMA is D
    # strided chunks of S*128*elem bytes (32-64 KiB at the default block).
    # NOTE(review item): if the axis=1 gather lowers poorly on some XLA
    # version, switch to jnp.take(embedding, idx, axis=0) + reshape/transpose.
    emb_to_t = embedding_to.astype(stream_dtype).T        # (D, B), tiny
    emb_from_t = embedding_from.astype(stream_dtype).T
    all_to = jnp.take(emb_to_t, to_idx, axis=1).reshape(D, Np // _LANES, _LANES)
    all_from = jnp.take(emb_from_t, from_idx, axis=1).reshape(D, Np // _LANES, _LANES)

    kernel = functools.partial(
        _umap_ce_kernel, a=float(a), b=float(b),
        repulsion_strength=float(repulsion_strength),
        batch_size=B, num_pairs=N, block_sublanes=S, dim=D)

    ce = pl.pallas_call(
        kernel,
        out_shape=jax.ShapeDtypeStruct((Np // _LANES, _LANES), jnp.float32),
        grid_spec=pltpu.PrefetchScalarGridSpec(
            num_scalar_prefetch=0,
            grid=(nb,),
            in_specs=[
                pl.BlockSpec((D, S, _LANES), lambda i: (0, i, 0)),
                pl.BlockSpec((D, S, _LANES), lambda i: (0, i, 0)),
            ],
            out_specs=pl.BlockSpec((S, _LANES), lambda i: (i, 0)),
        ),
        compiler_params=pltpu.CompilerParams(
            # Blocks are independent (no carried accumulator): shard across
            # TensorCores on v7x; harmless on single-TC v5e/v6e.
            # TODO(synk): on v7x, verify 2-TC sharding; try pltpu.CORE_PARALLEL
            # if the single "parallel" axis does not split across cores.
            dimension_semantics=("parallel",),
        ),
    )(all_to, all_from)

    # Padded pairs contribute exactly 0; divide by the true pair count.
    return jnp.sum(ce) / N


def umap_loss_ref(embedding_to, embedding_from, perm_key, *,
                  negative_sample_rate=5, repulsion_strength=1.0, a=_A, b=_B):
    """Pure-JAX f32 reference (same semantics as the PyTorch module)."""
    B, D = embedding_to.shape
    nsr = negative_sample_rate
    neg_to = jnp.repeat(embedding_to, nsr, axis=0)
    rep_neg = jnp.repeat(embedding_from, nsr, axis=0)
    perm = jax.random.permutation(perm_key, B * nsr)
    neg_from = rep_neg[perm]
    d = jnp.concatenate(
        [
            jnp.linalg.norm(embedding_to - embedding_from, axis=1),
            jnp.linalg.norm(neg_to - neg_from, axis=1),
        ],
        axis=0,
    )
    p_dist = 1.0 / (1.0 + a * d ** (2 * b))
    p_graph = jnp.concatenate([jnp.ones(B), jnp.zeros(B * nsr)])
    attraction = -p_graph * jnp.log(jnp.clip(p_dist, _EPS, 1.0))
    repellent = -(1.0 - p_graph) * jnp.log(jnp.clip(1.0 - p_dist, _EPS, 1.0)) * repulsion_strength
    return jnp.mean(attraction + repellent)


if __name__ == "__main__":
    key = jax.random.PRNGKey(0)
    k_to, k_from, k_perm = jax.random.split(key, 3)

    B, D = 8, 32  # batch_size=8, embedding dim=32; negative_sample_rate=5 -> N=48
    embedding_to = jax.random.normal(k_to, (B, D), dtype=jnp.float32)
    embedding_from = embedding_to + 0.1 * jax.random.normal(k_from, (B, D), dtype=jnp.float32)

    ref = jax.block_until_ready(umap_loss_ref(embedding_to, embedding_from, k_perm))

    # Exact (f32-streamed) path: tight tolerance against the f32 reference.
    loss_f32 = jax.block_until_ready(
        umap_loss(embedding_to, embedding_from, k_perm, stream_dtype=jnp.float32))
    assert jnp.allclose(loss_f32, ref, rtol=1e-4, atol=1e-4), (loss_f32, ref)

    # Default fast path: bf16-streamed gathered endpoints, f32 accumulation.
    loss_bf16 = jax.block_until_ready(
        umap_loss(embedding_to, embedding_from, k_perm, stream_dtype=jnp.bfloat16))
    assert jnp.allclose(loss_bf16, ref, rtol=2e-2, atol=2e-2), (loss_bf16, ref)

    print("KERNEL_OK")
</pallas_src>

<mosaic_0001>
module attributes {stable_mosaic.version = 11 : i64} {
  func.func @_umap_ce_kernel(%arg0: i32, %arg1: memref<32x8x128xf32, #tpu.memory_space<vmem>>, %arg2: memref<32x8x128xf32, #tpu.memory_space<vmem>>, %arg3: memref<8x128xf32, #tpu.memory_space<vmem>>) attributes {dimension_semantics = [#tpu.dimension_semantics<parallel>], iteration_bounds = array<i64: 1>, scalar_prefetch = 0 : i64, scratch_operands = 0 : i64, tpu.core_type = #tpu.core_type<tc>, window_params = [{transform_indices = @transform_0, window_bounds = array<i64: 32, 8, 128>}, {transform_indices = @transform_1, window_bounds = array<i64: 32, 8, 128>}, {transform_indices = @transform_2, window_bounds = array<i64: 8, 128>}]} {
    %cst = arith.constant 0.000000e+00 : f32
    %0 = vector.broadcast %cst : f32 to vector<8x128xf32>
    %c0_i32 = arith.constant 0 : i32
    %1 = arith.index_cast %c0_i32 : i32 to index
    %c0 = arith.constant 0 : index
    %c0_0 = arith.constant 0 : index
    %2 = vector.load %arg1[%1, %c0, %c0_0] : memref<32x8x128xf32, #tpu.memory_space<vmem>>, vector<1x8x128xf32>
    %3 = vector.shape_cast %2 : vector<1x8x128xf32> to vector<8x128xf32>
    %4 = arith.index_cast %c0_i32 : i32 to index
    %c0_1 = arith.constant 0 : index
    %c0_2 = arith.constant 0 : index
    %5 = vector.load %arg2[%4, %c0_1, %c0_2] : memref<32x8x128xf32, #tpu.memory_space<vmem>>, vector<1x8x128xf32>
    %6 = vector.shape_cast %5 : vector<1x8x128xf32> to vector<8x128xf32>
    %7 = arith.subf %3, %6 : vector<8x128xf32>
    %8 = arith.mulf %7, %7 : vector<8x128xf32>
    %9 = arith.addf %0, %8 : vector<8x128xf32>
    %c1_i32 = arith.constant 1 : i32
    %10 = arith.index_cast %c1_i32 : i32 to index
    %c0_3 = arith.constant 0 : index
    %c0_4 = arith.constant 0 : index
    %11 = vector.load %arg1[%10, %c0_3, %c0_4] : memref<32x8x128xf32, #tpu.memory_space<vmem>>, vector<1x8x128xf32>
    %12 = vector.shape_cast %11 : vector<1x8x128xf32> to vector<8x128xf32>
    %13 = arith.index_cast %c1_i32 : i32 to index
    %c0_5 = arith.constant 0 : index
    %c0_6 = arith.constant 0 : index
    %14 = vector.load %arg2[%13, %c0_5, %c0_6] : memref<32x8x128xf32, #tpu.memory_space<vmem>>, vector<1x8x128xf32>
    %15 = vector.shape_cast %14 : vector<1x8x128xf32> to vector<8x128xf32>
    %16 = arith.subf %12, %15 : vector<8x128xf32>
    %17 = arith.mulf %16, %16 : vector<8x128xf32>
    %18 = arith.addf %9, %17 : vector<8x128xf32>
    %c2_i32 = arith.constant 2 : i32
    %19 = arith.index_cast %c2_i32 : i32 to index
    %c0_7 = arith.constant 0 : index
    %c0_8 = arith.constant 0 : index
    %20 = vector.load %arg1[%19, %c0_7, %c0_8] : memref<32x8x128xf32, #tpu.memory_space<vmem>>, vector<1x8x128xf32>
    %21 = vector.shape_cast %20 : vector<1x8x128xf32> to vector<8x128xf32>
    %22 = arith.index_cast %c2_i32 : i32 to index
    %c0_9 = arith.constant 0 : index
    %c0_10 = arith.constant 0 : index
    %23 = vector.load %arg2[%22, %c0_9, %c0_10] : memref<32x8x128xf32, #tpu.memory_space<vmem>>, vector<1x8x128xf32>
    %24 = vector.shape_cast %23 : vector<1x8x128xf32> to vector<8x128xf32>
    %25 = arith.subf %21, %24 : vector<8x128xf32>
    %26 = arith.mulf %25, %25 : vector<8x128xf32>
    %27 = arith.addf %18, %26 : vector<8x128xf32>
    %c3_i32 = arith.constant 3 : i32
    %28 = arith.index_cast %c3_i32 : i32 to index
    %c0_11 = arith.constant 0 : index
    %c0_12 = arith.constant 0 : index
    %29 = vector.load %arg1[%28, %c0_11, %c0_12] : memref<32x8x128xf32, #tpu.memory_space<vmem>>, vector<1x8x128xf32>
    %30 = vector.shape_cast %29 : vector<1x8x128xf32> to vector<8x128xf32>
    %31 = arith.index_cast %c3_i32 : i32 to index
    %c0_13 = arith.constant 0 : index
    %c0_14 = arith.constant 0 : index
    %32 = vector.load %arg2[%31, %c0_13, %c0_14] : memref<32x8x128xf32, #tpu.memory_space<vmem>>, vector<1x8x128xf32>
    %33 = vector.shape_cast %32 : vector<1x8x128xf32> to vector<8x128xf32>
    %34 = arith.subf %30, %33 : vector<8x128xf32>
    %35 = arith.mulf %34, %34 : vector<8x128xf32>
    %36 = arith.addf %27, %35 : vector<8x128xf32>
    %c4_i32 = arith.constant 4 : i32
    %37 = arith.index_cast %c4_i32 : i32 to index
    %c0_15 = arith.constant 0 : index
    %c0_16 = arith.constant 0 : index
    %38 = vector.load %arg1[%37, %c0_15, %c0_16] : memref<32x8x128xf32, #tpu.memory_space<vmem>>, vector<1x8x128xf32>
    %39 = vector.shape_cast %38 : vector<1x8x128xf32> to vector<8x128xf32>
    %40 = arith.index_cast %c4_i32 : i32 to index
    %c0_17 = arith.constant 0 : index
    %c0_18 = arith.constant 0 : index
    %41 = vector.load %arg2[%40, %c0_17, %c0_18] : memref<32x8x128xf32, #tpu.memory_space<vmem>>, vector<1x8x128xf32>
    %42 = vector.shape_cast %41 : vector<1x8x128xf32> to vector<8x128xf32>
    %43 = arith.subf %39, %42 : vector<8x128xf32>
    %44 = arith.mulf %43, %43 : vector<8x128xf32>
    %45 = arith.addf %36, %44 : vector<8x128xf32>
    %c5_i32 = arith.constant 5 : i32
    %46 = arith.index_cast %c5_i32 : i32 to index
    %c0_19 = arith.constant 0 : index
    %c0_20 = arith.constant 0 : index
    %47 = vector.load %arg1[%46, %c0_19, %c0_20] : memref<32x8x128xf32, #tpu.memory_space<vmem>>, vector<1x8x128xf32>
    %48 = vector.shape_cast %47 : vector<1x8x128xf32> to vector<8x128xf32>
    %49 = arith.index_cast %c5_i32 : i32 to index
    %c0_21 = arith.constant 0 : index
    %c0_22 = arith.constant 0 : index
    %50 = vector.load %arg2[%49, %c0_21, %c0_22] : memref<32x8x128xf32, #tpu.memory_space<vmem>>, vector<1x8x128xf32>
    %51 = vector.shape_cast %50 : vector<1x8x128xf32> to vector<8x128xf32>
    %52 = arith.subf %48, %51 : vector<8x128xf32>
    %53 = arith.mulf %52, %52 : vector<8x128xf32>
    %54 = arith.addf %45, %53 : vector<8x128xf32>
    %c6_i32 = arith.constant 6 : i32
    %55 = arith.index_cast %c6_i32 : i32 to index
    %c0_23 = arith.constant 0 : index
    %c0_24 = arith.constant 0 : index
    %56 = vector.load %arg1[%55, %c0_23, %c0_24] : memref<32x8x128xf32, #tpu.memory_space<vmem>>, vector<1x8x128xf32>
    %57 = vector.shape_cast %56 : vector<1x8x128xf32> to vector<8x128xf32>
    %58 = arith.index_cast %c6_i32 : i32 to index
    %c0_25 = arith.constant 0 : index
    %c0_26 = arith.constant 0 : index
    %59 = vector.load %arg2[%58, %c0_25, %c0_26] : memref<32x8x128xf32, #tpu.memory_space<vmem>>, vector<1x8x128xf32>
    %60 = vector.shape_cast %59 : vector<1x8x128xf32> to vector<8x128xf32>
    %61 = arith.subf %57, %60 : vector<8x128xf32>
    %62 = arith.mulf %61, %61 : vector<8x128xf32>
    %63 = arith.addf %54, %62 : vector<8x128xf32>
    %c7_i32 = arith.constant 7 : i32
    %64 = arith.index_cast %c7_i32 : i32 to index
    %c0_27 = arith.constant 0 : index
    %c0_28 = arith.constant 0 : index
    %65 = vector.load %arg1[%64, %c0_27, %c0_28] : memref<32x8x128xf32, #tpu.memory_space<vmem>>, vector<1x8x128xf32>
    %66 = vector.shape_cast %65 : vector<1x8x128xf32> to vector<8x128xf32>
    %67 = arith.index_cast %c7_i32 : i32 to index
    %c0_29 = arith.constant 0 : index
    %c0_30 = arith.constant 0 : index
    %68 = vector.load %arg2[%67, %c0_29, %c0_30] : memref<32x8x128xf32, #tpu.memory_space<vmem>>, vector<1x8x128xf32>
    %69 = vector.shape_cast %68 : vector<1x8x128xf32> to vector<8x128xf32>
    %70 = arith.subf %66, %69 : vector<8x128xf32>
    %71 = arith.mulf %70, %70 : vector<8x128xf32>
    %72 = arith.addf %63, %71 : vector<8x128xf32>
    %c8_i32 = arith.constant 8 : i32
    %73 = arith.index_cast %c8_i32 : i32 to index
    %c0_31 = arith.constant 0 : index
    %c0_32 = arith.constant 0 : index
    %74 = vector.load %arg1[%73, %c0_31, %c0_32] : memref<32x8x128xf32, #tpu.memory_space<vmem>>, vector<1x8x128xf32>
    %75 = vector.shape_cast %74 : vector<1x8x128xf32> to vector<8x128xf32>
    %76 = arith.index_cast %c8_i32 : i32 to index
    %c0_33 = arith.constant 0 : index
    %c0_34 = arith.constant 0 : index
    %77 = vector.load %arg2[%76, %c0_33, %c0_34] : memref<32x8x128xf32, #tpu.memory_space<vmem>>, vector<1x8x128xf32>
    %78 = vector.shape_cast %77 : vector<1x8x128xf32> to vector<8x128xf32>
    %79 = arith.subf %75, %78 : vector<8x128xf32>
    %80 = arith.mulf %79, %79 : vector<8x128xf32>
    %81 = arith.addf %72, %80 : vector<8x128xf32>
    %c9_i32 = arith.constant 9 : i32
    %82 = arith.index_cast %c9_i32 : i32 to index
    %c0_35 = arith.constant 0 : index
    %c0_36 = arith.constant 0 : index
    %83 = vector.load %arg1[%82, %c0_35, %c0_36] : memref<32x8x128xf32, #tpu.memory_space<vmem>>, vector<1x8x128xf32>
    %84 = vector.shape_cast %83 : vector<1x8x128xf32> to vector<8x128xf32>
    %85 = arith.index_cast %c9_i32 : i32 to index
    %c0_37 = arith.constant 0 : index
    %c0_38 = arith.constant 0 : index
    %86 = vector.load %arg2[%85, %c0_37, %c0_38] : memref<32x8x128xf32, #tpu.memory_space<vmem>>, vector<1x8x128xf32>
    %87 = vector.shape_cast %86 : vector<1x8x128xf32> to vector<8x128xf32>
    %88 = arith.subf %84, %87 : vector<8x128xf32>
    %89 = arith.mulf %88, %88 : vector<8x128xf32>
    %90 = arith.addf %81, %89 : vector<8x128xf32>
    %c10_i32 = arith.constant 10 : i32
    %91 = arith.index_cast %c10_i32 : i32 to index
    %c0_39 = arith.constant 0 : index
    %c0_40 = arith.constant 0 : index
    %92 = vector.load %arg1[%91, %c0_39, %c0_40] : memref<32x8x128xf32, #tpu.memory_space<vmem>>, vector<1x8x128xf32>
    %93 = vector.shape_cast %92 : vector<1x8x128xf32> to vector<8x128xf32>
    %94 = arith.index_cast %c10_i32 : i32 to index
    %c0_41 = arith.constant 0 : index
    %c0_42 = arith.constant 0 : index
    %95 = vector.load %arg2[%94, %c0_41, %c0_42] : memref<32x8x128xf32, #tpu.memory_space<vmem>>, vector<1x8x128xf32>
    %96 = vector.shape_cast %95 : vector<1x8x128xf32> to vector<8x128xf32>
    %97 = arith.subf %93, %96 : vector<8x128xf32>
    %98 = arith.mulf %97, %97 : vector<8x128xf32>
    %99 = arith.addf %90, %98 : vector<8x128xf32>
    %c11_i32 = arith.constant 11 : i32
    %100 = arith.index_cast %c11_i32 : i32 to index
    %c0_43 = arith.constant 0 : index
    %c0_44 = arith.constant 0 : index
    %101 = vector.load %arg1[%100, %c0_43, %c0_44] : memref<32x8x128xf32, #tpu.memory_space<vmem>>, vector<1x8x128xf32>
    %102 = vector.shape_cast %101 : vector<1x8x128xf32> to vector<8x128xf32>
    %103 = arith.index_cast %c11_i32 : i32 to index
    %c0_45 = arith.constant 0 : index
    %c0_46 = arith.constant 0 : index
    %104 = vector.load %arg2[%103, %c0_45, %c0_46] : memref<32x8x128xf32, #tpu.memory_space<vmem>>, vector<1x8x128xf32>
    %105 = vector.shape_cast %104 : vector<1x8x128xf32> to vector<8x128xf32>
    %106 = arith.subf %102, %105 : vector<8x128xf32>
    %107 = arith.mulf %106, %106 : vector<8x128xf32>
    %108 = arith.addf %99, %107 : vector<8x128xf32>
    %c12_i32 = arith.constant 12 : i32
    %109 = arith.index_cast %c12_i32 : i32 to index
    %c0_47 = arith.constant 0 : index
    %c0_48 = arith.constant 0 : index
    %110 = vector.load %arg1[%109, %c0_47, %c0_48] : memref<32x8x128xf32, #tpu.memory_space<vmem>>, vector<1x8x128xf32>
    %111 = vector.shape_cast %110 : vector<1x8x128xf32> to vector<8x128xf32>
    %112 = arith.index_cast %c12_i32 : i32 to index
    %c0_49 = arith.constant 0 : index
    %c0_50 = arith.constant 0 : index
    %113 = vector.load %arg2[%112, %c0_49, %c0_50] : memref<32x8x128xf32, #tpu.memory_space<vmem>>, vector<1x8x128xf32>
    %114 = vector.shape_cast %113 : vector<1x8x128xf32> to vector<8x128xf32>
    %115 = arith.subf %111, %114 : vector<8x128xf32>
    %116 = arith.mulf %115, %115 : vector<8x128xf32>
    %117 = arith.addf %108, %116 : vector<8x128xf32>
    %c13_i32 = arith.constant 13 : i32
    %118 = arith.index_cast %c13_i32 : i32 to index
    %c0_51 = arith.constant 0 : index
    %c0_52 = arith.constant 0 : index
    %119 = vector.load %arg1[%118, %c0_51, %c0_52] : memref<32x8x128xf32, #tpu.memory_space<vmem>>, vector<1x8x128xf32>
    %120 = vector.shape_cast %119 : vector<1x8x128xf32> to vector<8x128xf32>
    %121 = arith.index_cast %c13_i32 : i32 to index
    %c0_53 = arith.constant 0 : index
    %c0_54 = arith.constant 0 : index
    %122 = vector.load %arg2[%121, %c0_53, %c0_54] : memref<32x8x128xf32, #tpu.memory_space<vmem>>, vector<1x8x128xf32>
    %123 = vector.shape_cast %122 : vector<1x8x128xf32> to vector<8x128xf32>
    %124 = arith.subf %120, %123 : vector<8x128xf32>
    %125 = arith.mulf %124, %124 : vector<8x128xf32>
    %126 = arith.addf %117, %125 : vector<8x128xf32>
    %c14_i32 = arith.constant 14 : i32
    %127 = arith.index_cast %c14_i32 : i32 to index
    %c0_55 = arith.constant 0 : index
    %c0_56 = arith.constant 0 : index
    %128 = vector.load %arg1[%127, %c0_55, %c0_56] : memref<32x8x128xf32, #tpu.memory_space<vmem>>, vector<1x8x128xf32>
    %129 = vector.shape_cast %128 : vector<1x8x128xf32> to vector<8x128xf32>
    %130 = arith.index_cast %c14_i32 : i32 to index
    %c0_57 = arith.constant 0 : index
    %c0_58 = arith.constant 0 : index
    %131 = vector.load %arg2[%130, %c0_57, %c0_58] : memref<32x8x128xf32, #tpu.memory_space<vmem>>, vector<1x8x128xf32>
    %132 = vector.shape_cast %131 : vector<1x8x128xf32> to vector<8x128xf32>
    %133 = arith.subf %129, %132 : vector<8x128xf32>
    %134 = arith.mulf %133, %133 : vector<8x128xf32>
    %135 = arith.addf %126, %134 : vector<8x128xf32>
    %c15_i32 = arith.constant 15 : i32
    %136 = arith.index_cast %c15_i32 : i32 to index
    %c0_59 = arith.constant 0 : index
    %c0_60 = arith.constant 0 : index
    %137 = vector.load %arg1[%136, %c0_59, %c0_60] : memref<32x8x128xf32, #tpu.memory_space<vmem>>, vector<1x8x128xf32>
    %138 = vector.shape_cast %137 : vector<1x8x128xf32> to vector<8x128xf32>
    %139 = arith.index_cast %c15_i32 : i32 to index
    %c0_61 = arith.constant 0 : index
    %c0_62 = arith.constant 0 : index
    %140 = vector.load %arg2[%139, %c0_61, %c0_62] : memref<32x8x128xf32, #tpu.memory_space<vmem>>, vector<1x8x128xf32>
    %141 = vector.shape_cast %140 : vector<1x8x128xf32> to vector<8x128xf32>
    %142 = arith.subf %138, %141 : vector<8x128xf32>
    %143 = arith.mulf %142, %142 : vector<8x128xf32>
    %144 = arith.addf %135, %143 : vector<8x128xf32>
    %c16_i32 = arith.constant 16 : i32
    %145 = arith.index_cast %c16_i32 : i32 to index
    %c0_63 = arith.constant 0 : index
    %c0_64 = arith.constant 0 : index
    %146 = vector.load %arg1[%145, %c0_63, %c0_64] : memref<32x8x128xf32, #tpu.memory_space<vmem>>, vector<1x8x128xf32>
    %147 = vector.shape_cast %146 : vector<1x8x128xf32> to vector<8x128xf32>
    %148 = arith.index_cast %c16_i32 : i32 to index
    %c0_65 = arith.constant 0 : index
    %c0_66 = arith.constant 0 : index
    %149 = vector.load %arg2[%148, %c0_65, %c0_66] : memref<32x8x128xf32, #tpu.memory_space<vmem>>, vector<1x8x128xf32>
    %150 = vector.shape_cast %149 : vector<1x8x128xf32> to vector<8x128xf32>
    %151 = arith.subf %147, %150 : vector<8x128xf32>
    %152 = arith.mulf %151, %151 : vector<8x128xf32>
    %153 = arith.addf %144, %152 : vector<8x128xf32>
    %c17_i32 = arith.constant 17 : i32
    %154 = arith.index_cast %c17_i32 : i32 to index
    %c0_67 = arith.constant 0 : index
    %c0_68 = arith.constant 0 : index
    %155 = vector.load %arg1[%154, %c0_67, %c0_68] : memref<32x8x128xf32, #tpu.memory_space<vmem>>, vector<1x8x128xf32>
    %156 = vector.shape_cast %155 : vector<1x8x128xf32> to vector<8x128xf32>
    %157 = arith.index_cast %c17_i32 : i32 to index
    %c0_69 = arith.constant 0 : index
    %c0_70 = arith.constant 0 : index
    %158 = vector.load %arg2[%157, %c0_69, %c0_70] : memref<32x8x128xf32, #tpu.memory_space<vmem>>, vector<1x8x128xf32>
    %159 = vector.shape_cast %158 : vector<1x8x128xf32> to vector<8x128xf32>
    %160 = arith.subf %156, %159 : vector<8x128xf32>
    %161 = arith.mulf %160, %160 : vector<8x128xf32>
    %162 = arith.addf %153, %161 : vector<8x128xf32>
    %c18_i32 = arith.constant 18 : i32
    %163 = arith.index_cast %c18_i32 : i32 to index
    %c0_71 = arith.constant 0 : index
    %c0_72 = arith.constant 0 : index
    %164 = vector.load %arg1[%163, %c0_71, %c0_72] : memref<32x8x128xf32, #tpu.memory_space<vmem>>, vector<1x8x128xf32>
    %165 = vector.shape_cast %164 : vector<1x8x128xf32> to vector<8x128xf32>
    %166 = arith.index_cast %c18_i32 : i32 to index
    %c0_73 = arith.constant 0 : index
    %c0_74 = arith.constant 0 : index
    %167 = vector.load %arg2[%166, %c0_73, %c0_74] : memref<32x8x128xf32, #tpu.memory_space<vmem>>, vector<1x8x128xf32>
    %168 = vector.shape_cast %167 : vector<1x8x128xf32> to vector<8x128xf32>
    %169 = arith.subf %165, %168 : vector<8x128xf32>
    %170 = arith.mulf %169, %169 : vector<8x128xf32>
    %171 = arith.addf %162, %170 : vector<8x128xf32>
    %c19_i32 = arith.constant 19 : i32
    %172 = arith.index_cast %c19_i32 : i32 to index
    %c0_75 = arith.constant 0 : index
    %c0_76 = arith.constant 0 : index
    %173 = vector.load %arg1[%172, %c0_75, %c0_76] : memref<32x8x128xf32, #tpu.memory_space<vmem>>, vector<1x8x128xf32>
    %174 = vector.shape_cast %173 : vector<1x8x128xf32> to vector<8x128xf32>
    %175 = arith.index_cast %c19_i32 : i32 to index
    %c0_77 = arith.constant 0 : index
    %c0_78 = arith.constant 0 : index
    %176 = vector.load %arg2[%175, %c0_77, %c0_78] : memref<32x8x128xf32, #tpu.memory_space<vmem>>, vector<1x8x128xf32>
    %177 = vector.shape_cast %176 : vector<1x8x128xf32> to vector<8x128xf32>
    %178 = arith.subf %174, %177 : vector<8x128xf32>
    %179 = arith.mulf %178, %178 : vector<8x128xf32>
    %180 = arith.addf %171, %179 : vector<8x128xf32>
    %c20_i32 = arith.constant 20 : i32
    %181 = arith.index_cast %c20_i32 : i32 to index
    %c0_79 = arith.constant 0 : index
    %c0_80 = arith.constant 0 : index
    %182 = vector.load %arg1[%181, %c0_79, %c0_80] : memref<32x8x128xf32, #tpu.memory_space<vmem>>, vector<1x8x128xf32>
    %183 = vector.shape_cast %182 : vector<1x8x128xf32> to vector<8x128xf32>
    %184 = arith.index_cast %c20_i32 : i32 to index
    %c0_81 = arith.constant 0 : index
    %c0_82 = arith.constant 0 : index
    %185 = vector.load %arg2[%184, %c0_81, %c0_82] : memref<32x8x128xf32, #tpu.memory_space<vmem>>, vector<1x8x128xf32>
    %186 = vector.shape_cast %185 : vector<1x8x128xf32> to vector<8x128xf32>
    %187 = arith.subf %183, %186 : vector<8x128xf32>
    %188 = arith.mulf %187, %187 : vector<8x128xf32>
    %189 = arith.addf %180, %188 : vector<8x128xf32>
    %c21_i32 = arith.constant 21 : i32
    %190 = arith.index_cast %c21_i32 : i32 to index
    %c0_83 = arith.constant 0 : index
    %c0_84 = arith.constant 0 : index
    %191 = vector.load %arg1[%190, %c0_83, %c0_84] : memref<32x8x128xf32, #tpu.memory_space<vmem>>, vector<1x8x128xf32>
    %192 = vector.shape_cast %191 : vector<1x8x128xf32> to vector<8x128xf32>
    %193 = arith.index_cast %c21_i32 : i32 to index
    %c0_85 = arith.constant 0 : index
    %c0_86 = arith.constant 0 : index
    %194 = vector.load %arg2[%193, %c0_85, %c0_86] : memref<32x8x128xf32, #tpu.memory_space<vmem>>, vector<1x8x128xf32>
    %195 = vector.shape_cast %194 : vector<1x8x128xf32> to vector<8x128xf32>
    %196 = arith.subf %192, %195 : vector<8x128xf32>
    %197 = arith.mulf %196, %196 : vector<8x128xf32>
    %198 = arith.addf %189, %197 : vector<8x128xf32>
    %c22_i32 = arith.constant 22 : i32
    %199 = arith.index_cast %c22_i32 : i32 to index
    %c0_87 = arith.constant 0 : index
    %c0_88 = arith.constant 0 : index
    %200 = vector.load %arg1[%199, %c0_87, %c0_88] : memref<32x8x128xf32, #tpu.memory_space<vmem>>, vector<1x8x128xf32>
    %201 = vector.shape_cast %200 : vector<1x8x128xf32> to vector<8x128xf32>
    %202 = arith.index_cast %c22_i32 : i32 to index
    %c0_89 = arith.constant 0 : index
    %c0_90 = arith.constant 0 : index
    %203 = vector.load %arg2[%202, %c0_89, %c0_90] : memref<32x8x128xf32, #tpu.memory_space<vmem>>, vector<1x8x128xf32>
    %204 = vector.shape_cast %203 : vector<1x8x128xf32> to vector<8x128xf32>
    %205 = arith.subf %201, %204 : vector<8x128xf32>
    %206 = arith.mulf %205, %205 : vector<8x128xf32>
    %207 = arith.addf %198, %206 : vector<8x128xf32>
    %c23_i32 = arith.constant 23 : i32
    %208 = arith.index_cast %c23_i32 : i32 to index
    %c0_91 = arith.constant 0 : index
    %c0_92 = arith.constant 0 : index
    %209 = vector.load %arg1[%208, %c0_91, %c0_92] : memref<32x8x128xf32, #tpu.memory_space<vmem>>, vector<1x8x128xf32>
    %210 = vector.shape_cast %209 : vector<1x8x128xf32> to vector<8x128xf32>
    %211 = arith.index_cast %c23_i32 : i32 to index
    %c0_93 = arith.constant 0 : index
    %c0_94 = arith.constant 0 : index
    %212 = vector.load %arg2[%211, %c0_93, %c0_94] : memref<32x8x128xf32, #tpu.memory_space<vmem>>, vector<1x8x128xf32>
    %213 = vector.shape_cast %212 : vector<1x8x128xf32> to vector<8x128xf32>
    %214 = arith.subf %210, %213 : vector<8x128xf32>
    %215 = arith.mulf %214, %214 : vector<8x128xf32>
    %216 = arith.addf %207, %215 : vector<8x128xf32>
    %c24_i32 = arith.constant 24 : i32
    %217 = arith.index_cast %c24_i32 : i32 to index
    %c0_95 = arith.constant 0 : index
    %c0_96 = arith.constant 0 : index
    %218 = vector.load %arg1[%217, %c0_95, %c0_96] : memref<32x8x128xf32, #tpu.memory_space<vmem>>, vector<1x8x128xf32>
    %219 = vector.shape_cast %218 : vector<1x8x128xf32> to vector<8x128xf32>
    %220 = arith.index_cast %c24_i32 : i32 to index
    %c0_97 = arith.constant 0 : index
    %c0_98 = arith.constant 0 : index
    %221 = vector.load %arg2[%220, %c0_97, %c0_98] : memref<32x8x128xf32, #tpu.memory_space<vmem>>, vector<1x8x128xf32>
    %222 = vector.shape_cast %221 : vector<1x8x128xf32> to vector<8x128xf32>
    %223 = arith.subf %219, %222 : vector<8x128xf32>
    %224 = arith.mulf %223, %223 : vector<8x128xf32>
    %225 = arith.addf %216, %224 : vector<8x128xf32>
    %c25_i32 = arith.constant 25 : i32
    %226 = arith.index_cast %c25_i32 : i32 to index
    %c0_99 = arith.constant 0 : index
    %c0_100 = arith.constant 0 : index
    %227 = vector.load %arg1[%226, %c0_99, %c0_100] : memref<32x8x128xf32, #tpu.memory_space<vmem>>, vector<1x8x128xf32>
    %228 = vector.shape_cast %227 : vector<1x8x128xf32> to vector<8x128xf32>
    %229 = arith.index_cast %c25_i32 : i32 to index
    %c0_101 = arith.constant 0 : index
    %c0_102 = arith.constant 0 : index
    %230 = vector.load %arg2[%229, %c0_101, %c0_102] : memref<32x8x128xf32, #tpu.memory_space<vmem>>, vector<1x8x128xf32>
    %231 = vector.shape_cast %230 : vector<1x8x128xf32> to vector<8x128xf32>
    %232 = arith.subf %228, %231 : vector<8x128xf32>
    %233 = arith.mulf %232, %232 : vector<8x128xf32>
    %234 = arith.addf %225, %233 : vector<8x128xf32>
    %c26_i32 = arith.constant 26 : i32
    %235 = arith.index_cast %c26_i32 : i32 to index
    %c0_103 = arith.constant 0 : index
    %c0_104 = arith.constant 0 : index
    %236 = vector.load %arg1[%235, %c0_103, %c0_104] : memref<32x8x128xf32, #tpu.memory_space<vmem>>, vector<1x8x128xf32>
    %237 = vector.shape_cast %236 : vector<1x8x128xf32> to vector<8x128xf32>
    %238 = arith.index_cast %c26_i32 : i32 to index
    %c0_105 = arith.constant 0 : index
    %c0_106 = arith.constant 0 : index
    %239 = vector.load %arg2[%238, %c0_105, %c0_106] : memref<32x8x128xf32, #tpu.memory_space<vmem>>, vector<1x8x128xf32>
    %240 = vector.shape_cast %239 : vector<1x8x128xf32> to vector<8x128xf32>
    %241 = arith.subf %237, %240 : vector<8x128xf32>
    %242 = arith.mulf %241, %241 : vector<8x128xf32>
    %243 = arith.addf %234, %242 : vector<8x128xf32>
    %c27_i32 = arith.constant 27 : i32
    %244 = arith.index_cast %c27_i32 : i32 to index
    %c0_107 = arith.constant 0 : index
    %c0_108 = arith.constant 0 : index
    %245 = vector.load %arg1[%244, %c0_107, %c0_108] : memref<32x8x128xf32, #tpu.memory_space<vmem>>, vector<1x8x128xf32>
    %246 = vector.shape_cast %245 : vector<1x8x128xf32> to vector<8x128xf32>
    %247 = arith.index_cast %c27_i32 : i32 to index
    %c0_109 = arith.constant 0 : index
    %c0_110 = arith.constant 0 : index
    %248 = vector.load %arg2[%247, %c0_109, %c0_110] : memref<32x8x128xf32, #tpu.memory_space<vmem>>, vector<1x8x128xf32>
    %249 = vector.shape_cast %248 : vector<1x8x128xf32> to vector<8x128xf32>
    %250 = arith.subf %246, %249 : vector<8x128xf32>
    %251 = arith.mulf %250, %250 : vector<8x128xf32>
    %252 = arith.addf %243, %251 : vector<8x128xf32>
    %c28_i32 = arith.constant 28 : i32
    %253 = arith.index_cast %c28_i32 : i32 to index
    %c0_111 = arith.constant 0 : index
    %c0_112 = arith.constant 0 : index
    %254 = vector.load %arg1[%253, %c0_111, %c0_112] : memref<32x8x128xf32, #tpu.memory_space<vmem>>, vector<1x8x128xf32>
    %255 = vector.shape_cast %254 : vector<1x8x128xf32> to vector<8x128xf32>
    %256 = arith.index_cast %c28_i32 : i32 to index
    %c0_113 = arith.constant 0 : index
    %c0_114 = arith.constant 0 : index
    %257 = vector.load %arg2[%256, %c0_113, %c0_114] : memref<32x8x128xf32, #tpu.memory_space<vmem>>, vector<1x8x128xf32>
    %258 = vector.shape_cast %257 : vector<1x8x128xf32> to vector<8x128xf32>
    %259 = arith.subf %255, %258 : vector<8x128xf32>
    %260 = arith.mulf %259, %259 : vector<8x128xf32>
    %261 = arith.addf %252, %260 : vector<8x128xf32>
    %c29_i32 = arith.constant 29 : i32
    %262 = arith.index_cast %c29_i32 : i32 to index
    %c0_115 = arith.constant 0 : index
    %c0_116 = arith.constant 0 : index
    %263 = vector.load %arg1[%262, %c0_115, %c0_116] : memref<32x8x128xf32, #tpu.memory_space<vmem>>, vector<1x8x128xf32>
    %264 = vector.shape_cast %263 : vector<1x8x128xf32> to vector<8x128xf32>
    %265 = arith.index_cast %c29_i32 : i32 to index
    %c0_117 = arith.constant 0 : index
    %c0_118 = arith.constant 0 : index
    %266 = vector.load %arg2[%265, %c0_117, %c0_118] : memref<32x8x128xf32, #tpu.memory_space<vmem>>, vector<1x8x128xf32>
    %267 = vector.shape_cast %266 : vector<1x8x128xf32> to vector<8x128xf32>
    %268 = arith.subf %264, %267 : vector<8x128xf32>
    %269 = arith.mulf %268, %268 : vector<8x128xf32>
    %270 = arith.addf %261, %269 : vector<8x128xf32>
    %c30_i32 = arith.constant 30 : i32
    %271 = arith.index_cast %c30_i32 : i32 to index
    %c0_119 = arith.constant 0 : index
    %c0_120 = arith.constant 0 : index
    %272 = vector.load %arg1[%271, %c0_119, %c0_120] : memref<32x8x128xf32, #tpu.memory_space<vmem>>, vector<1x8x128xf32>
    %273 = vector.shape_cast %272 : vector<1x8x128xf32> to vector<8x128xf32>
    %274 = arith.index_cast %c30_i32 : i32 to index
    %c0_121 = arith.constant 0 : index
    %c0_122 = arith.constant 0 : index
    %275 = vector.load %arg2[%274, %c0_121, %c0_122] : memref<32x8x128xf32, #tpu.memory_space<vmem>>, vector<1x8x128xf32>
    %276 = vector.shape_cast %275 : vector<1x8x128xf32> to vector<8x128xf32>
    %277 = arith.subf %273, %276 : vector<8x128xf32>
    %278 = arith.mulf %277, %277 : vector<8x128xf32>
    %279 = arith.addf %270, %278 : vector<8x128xf32>
    %c31_i32 = arith.constant 31 : i32
    %280 = arith.index_cast %c31_i32 : i32 to index
    %c0_123 = arith.constant 0 : index
    %c0_124 = arith.constant 0 : index
    %281 = vector.load %arg1[%280, %c0_123, %c0_124] : memref<32x8x128xf32, #tpu.memory_space<vmem>>, vector<1x8x128xf32>
    %282 = vector.shape_cast %281 : vector<1x8x128xf32> to vector<8x128xf32>
    %283 = arith.index_cast %c31_i32 : i32 to index
    %c0_125 = arith.constant 0 : index
    %c0_126 = arith.constant 0 : index
    %284 = vector.load %arg2[%283, %c0_125, %c0_126] : memref<32x8x128xf32, #tpu.memory_space<vmem>>, vector<1x8x128xf32>
    %285 = vector.shape_cast %284 : vector<1x8x128xf32> to vector<8x128xf32>
    %286 = arith.subf %282, %285 : vector<8x128xf32>
    %287 = arith.mulf %286, %286 : vector<8x128xf32>
    %288 = arith.addf %279, %287 : vector<8x128xf32>
    %c32_i32 = arith.constant 32 : i32
    %cst_127 = arith.constant 1.000000e-30 : f32
    %289 = vector.broadcast %cst_127 : f32 to vector<8x128xf32>
    %290 = arith.maximumf %288, %289 : vector<8x128xf32>
    %291 = math.log %290 : vector<8x128xf32>
    %cst_128 = arith.constant 0.895060896 : f32
    %292 = vector.broadcast %cst_128 : f32 to vector<8x128xf32>
    %293 = arith.mulf %292, %291 : vector<8x128xf32>
    %294 = math.exp %293 : vector<8x128xf32>
    %cst_129 = arith.constant 1.57694352 : f32
    %295 = vector.broadcast %cst_129 : f32 to vector<8x128xf32>
    %296 = arith.mulf %295, %294 : vector<8x128xf32>
    %cst_130 = arith.constant 1.000000e+00 : f32
    %297 = vector.broadcast %cst_130 : f32 to vector<8x128xf32>
    %298 = arith.addf %297, %296 : vector<8x128xf32>
    %cst_131 = arith.constant 1.000000e+00 : f32
    %299 = vector.broadcast %cst_131 : f32 to vector<8x128xf32>
    %300 = arith.divf %299, %298 : vector<8x128xf32>
    %c1024_i32 = arith.constant 1024 : i32
    %301 = arith.muli %arg0, %c1024_i32 : i32
    %302 = tpu.iota {dimensions = array<i32: 0>} : vector<8x128xi32>
    %c128_i32 = arith.constant 128 : i32
    %303 = vector.broadcast %c128_i32 : i32 to vector<8x128xi32>
    %304 = arith.muli %302, %303 : vector<8x128xi32>
    %305 = vector.broadcast %301 : i32 to vector<8x128xi32>
    %306 = arith.addi %305, %304 : vector<8x128xi32>
    %307 = tpu.iota {dimensions = array<i32: 1>} : vector<8x128xi32>
    %308 = arith.addi %306, %307 : vector<8x128xi32>
    %c8_i32_132 = arith.constant 8 : i32
    %309 = vector.broadcast %c8_i32_132 : i32 to vector<8x128xi32>
    %310 = arith.cmpi slt, %308, %309 : vector<8x128xi32>
    %c48_i32 = arith.constant 48 : i32
    %311 = vector.broadcast %c48_i32 : i32 to vector<8x128xi32>
    %312 = arith.cmpi slt, %308, %311 : vector<8x128xi32>
    %cst_133 = arith.constant 9.99999974E-5 : f32
    %cst_134 = arith.constant 1.000000e+00 : f32
    %313 = vector.broadcast %cst_133 : f32 to vector<8x128xf32>
    %314 = arith.maximumf %313, %300 : vector<8x128xf32>
    %315 = vector.broadcast %cst_134 : f32 to vector<8x128xf32>
    %316 = arith.minimumf %315, %314 : vector<8x128xf32>
    %cst_135 = arith.constant 1.000000e+00 : f32
    %317 = vector.broadcast %cst_135 : f32 to vector<8x128xf32>
    %318 = arith.subf %317, %300 : vector<8x128xf32>
    %cst_136 = arith.constant 9.99999974E-5 : f32
    %cst_137 = arith.constant 1.000000e+00 : f32
    %319 = vector.broadcast %cst_136 : f32 to vector<8x128xf32>
    %320 = arith.maximumf %319, %318 : vector<8x128xf32>
    %321 = vector.broadcast %cst_137 : f32 to vector<8x128xf32>
    %322 = arith.minimumf %321, %320 : vector<8x128xf32>
    %323 = arith.select %310, %316, %322 : vector<8x128xi1>, vector<8x128xf32>
    %cst_138 = arith.constant 1.000000e+00 : f32
    %cst_139 = arith.constant 1.000000e+00 : f32
    %324 = vector.broadcast %cst_138 : f32 to vector<8x128xf32>
    %325 = vector.broadcast %cst_139 : f32 to vector<8x128xf32>
    %326 = arith.select %310, %324, %325 : vector<8x128xi1>, vector<8x128xf32>
    %cst_140 = arith.constant 0.000000e+00 : f32
    %327 = vector.broadcast %cst_140 : f32 to vector<8x128xf32>
    %328 = arith.subf %327, %326 : vector<8x128xf32>
    %329 = math.log %323 : vector<8x128xf32>
    %330 = arith.mulf %328, %329 : vector<8x128xf32>
    %cst_141 = arith.constant 0.000000e+00 : f32
    %331 = vector.broadcast %cst_141 : f32 to vector<8x128xf32>
    %332 = arith.select %312, %330, %331 : vector<8x128xi1>, vector<8x128xf32>
    %c0_142 = arith.constant 0 : index
    %c0_143 = arith.constant 0 : index
    %333 = vector.load %arg3[%c0_142, %c0_143] : memref<8x128xf32, #tpu.memory_space<vmem>>, vector<8x128xf32>
    tpu.vector_store %arg3[%c0_142, %c0_143], %332 {strides = array<i32>} : memref<8x128xf32, #tpu.memory_space<vmem>>, vector<8x128xf32>,
    return
  }
  func.func @transform_0(%arg0: i32) -> (i32, i32, i32) {
    %c0_i32 = arith.constant 0 : i32
    %c0_i32_0 = arith.constant 0 : i32
    %c0_i32_1 = arith.constant 0 : i32
    return %c0_i32, %arg0, %c0_i32_0 : i32, i32, i32
  }
  func.func @transform_1(%arg0: i32) -> (i32, i32, i32) {
    %c0_i32 = arith.constant 0 : i32
    %c0_i32_0 = arith.constant 0 : i32
    %c0_i32_1 = arith.constant 0 : i32
    return %c0_i32, %arg0, %c0_i32_0 : i32, i32, i32
  }
  func.func @transform_2(%arg0: i32) -> (i32, i32) {
    %c0_i32 = arith.constant 0 : i32
    %c0_i32_0 = arith.constant 0 : i32
    return %arg0, %c0_i32 : i32, i32
  }
}

</mosaic_0001>

<llo_original>
// kernel: tpu_custom_call.1
$region0: #{tpu_custom_call.1}
  #allocation0 [shape = 'u32[]', space=smem, size = 0x4, offset = 0x4, fixed_abs, tag = 'smem constant byte address 0x4 - core index']
  #allocation1 [shape = 'u32[72,128]{1,0:T(1,128)}', space=vmem, size = 0x9000, scoped, tag = 'internal scratch']
  %s0 = inlined_call_operand.hbm [shape: f32[32,8,128], index: 0, kind: input, shape index: {}]
  %s1 = inlined_call_operand.hbm [shape: f32[32,8,128], index: 1, kind: input, shape index: {}]
  %s2 = inlined_call_operand.hbm [shape: f32[8,128], index: 2, kind: output, shape index: {}]
  %s3 = sld [smem:[#allocation0]]
  $region26: #{tpu_custom_call.1} parent=0
    _
  %s5 = ssub.s32 1, %s3
  %s6 = scalar_select 0, %s5, %s3
  $region1: #{tpu_custom_call.1} parent=0
    #allocation2 [shape = 'u8[131072]{0}', space=vmem, size = 0x20000, scoped, tag = 'input window, operand 0, single buffered']
    #allocation3 [shape = 's32[1]{0}', space=sflag, size = 0x4, scoped, tag = 'scoped memory for tpu_custom_call.1']
    #allocation4 [shape = 's32[1]{0}', space=sflag, size = 0x4, scoped, tag = 'scoped memory for tpu_custom_call.1']
    #allocation5 [shape = 'u8[131072]{0}', space=vmem, size = 0x20000, scoped, tag = 'input window, operand 1, single buffered']
    #allocation6 [shape = 's32[1]{0}', space=sflag, size = 0x4, scoped, tag = 'scoped memory for tpu_custom_call.1']
    #allocation7 [shape = 'u8[4096]{0}', space=vmem, size = 0x1000, scoped, tag = 'output window, operand 0, single buffered']
    %7 = vsyncpa [#allocation3], 0
    %8 = vsyncpa [#allocation6], 0
    %9 = vsyncpa [#allocation4], 0
    // Predicated region
    $region2: #{tpu_custom_call.1} parent=1 // pred_check
      _
    $region3: #{tpu_custom_call.1} parent=1 // pred_check_branch
      %11 = sbr.rel (0) target = $region5
    $region4: #{tpu_custom_call.1} parent=1 // pred_region
      %13 = vsyncadd [#allocation3], 0
      %s14 = sshll.u32 %s0, 4
      %s15 = int_to_ptr.hbm [resolvable:$true] %s14
      %s16 = sshll.u32 [#allocation2], 4
      %s17 = int_to_ptr.vmem [resolvable:$true] %s16
      %22 = dma.hbm_to_vmem [thread:$0]  %s15, 4096, %s17, [#allocation3], 128, 128, 8
    $region5: #{tpu_custom_call.1} parent=1 // pred_fallthru
      _
    // Predicated region
    $region6: #{tpu_custom_call.1} parent=1 // pred_check
      _
    $region7: #{tpu_custom_call.1} parent=1 // pred_check_branch
      %24 = sbr.rel (0) target = $region9
    $region8: #{tpu_custom_call.1} parent=1 // pred_region
      %26 = vsyncadd [#allocation6], 0
      %s27 = sshll.u32 %s1, 4
      %s28 = int_to_ptr.hbm [resolvable:$true] %s27
      %s29 = sshll.u32 [#allocation5], 4
      %s30 = int_to_ptr.vmem [resolvable:$true] %s29
      %35 = dma.hbm_to_vmem [thread:$0]  %s28, 4096, %s30, [#allocation6], 128, 128, 8
    $region9: #{tpu_custom_call.1} parent=1 // pred_fallthru
      _
    // Predicated region
    $region10: #{tpu_custom_call.1} parent=1 // pred_check
      _
    $region11: #{tpu_custom_call.1} parent=1 // pred_check_branch
      %37 = sbr.rel (0) target = $region13
    $region12: #{tpu_custom_call.1} parent=1 // pred_region
      %39 = dma.done [#allocation3], 4096
    $region13: #{tpu_custom_call.1} parent=1 // pred_fallthru
      _
    // Predicated region
    $region14: #{tpu_custom_call.1} parent=1 // pred_check
      _
    $region15: #{tpu_custom_call.1} parent=1 // pred_check_branch
      %41 = sbr.rel (0) target = $region17
    $region16: #{tpu_custom_call.1} parent=1 // pred_region
      %43 = dma.done [#allocation6], 4096
    $region17: #{tpu_custom_call.1} parent=1 // pred_fallthru
      _
    %v44 = vld [vmem:[#allocation2] sm:$0xff]
    %v45 = vld [vmem:[#allocation5] sm:$0xff]
    %v46 = vsub.f32 %v44, %v45
    %v47 = vmul.f32 %v46, %v46
    %v48 = vadd.f32 %v47, 0.0
    %s49 = scalar_lea.vmem [#allocation2], 8
    %v50 = vld [vmem:[%s49] sm:$0xff]
    %s51 = scalar_lea.vmem [#allocation5], 8
    %v52 = vld [vmem:[%s51] sm:$0xff]
    %v53 = vsub.f32 %v50, %v52
    %v54 = vmul.f32 %v53, %v53
    %v55 = vadd.f32 %v48, %v54
    %s56 = scalar_lea.vmem [#allocation2], 16
    %v57 = vld [vmem:[%s56] sm:$0xff]
    %s58 = scalar_lea.vmem [#allocation5], 16
    %v59 = vld [vmem:[%s58] sm:$0xff]
    %v60 = vsub.f32 %v57, %v59
    %v61 = vmul.f32 %v60, %v60
    %v62 = vadd.f32 %v55, %v61
    %s63 = scalar_lea.vmem [#allocation2], 24
    %v64 = vld [vmem:[%s63] sm:$0xff]
    %s65 = scalar_lea.vmem [#allocation5], 24
    %v66 = vld [vmem:[%s65] sm:$0xff]
    %v67 = vsub.f32 %v64, %v66
    %v68 = vmul.f32 %v67, %v67
    %v69 = vadd.f32 %v62, %v68
    %s70 = scalar_lea.vmem [#allocation2], 32
    %v71 = vld [vmem:[%s70] sm:$0xff]
    %s72 = scalar_lea.vmem [#allocation5], 32
    %v73 = vld [vmem:[%s72] sm:$0xff]
    %v74 = vsub.f32 %v71, %v73
    %v75 = vmul.f32 %v74, %v74
    %v76 = vadd.f32 %v69, %v75
    %s77 = scalar_lea.vmem [#allocation2], 40
    %v78 = vld [vmem:[%s77] sm:$0xff]
    %s79 = scalar_lea.vmem [#allocation5], 40
    %v80 = vld [vmem:[%s79] sm:$0xff]
    %v81 = vsub.f32 %v78, %v80
    %v82 = vmul.f32 %v81, %v81
    %v83 = vadd.f32 %v76, %v82
    %s84 = scalar_lea.vmem [#allocation2], 48
    %v85 = vld [vmem:[%s84] sm:$0xff]
    %s86 = scalar_lea.vmem [#allocation5], 48
    %v87 = vld [vmem:[%s86] sm:$0xff]
    %v88 = vsub.f32 %v85, %v87
    %v89 = vmul.f32 %v88, %v88
    %v90 = vadd.f32 %v83, %v89
    %s91 = scalar_lea.vmem [#allocation2], 56
    %v92 = vld [vmem:[%s91] sm:$0xff]
    %s93 = scalar_lea.vmem [#allocation5], 56
    %v94 = vld [vmem:[%s93] sm:$0xff]
    %v95 = vsub.f32 %v92, %v94
    %v96 = vmul.f32 %v95, %v95
    %v97 = vadd.f32 %v90, %v96
    %s98 = scalar_lea.vmem [#allocation2], 64
    %v99 = vld [vmem:[%s98] sm:$0xff]
    %s100 = scalar_lea.vmem [#allocation5], 64
    %v101 = vld [vmem:[%s100] sm:$0xff]
    %v102 = vsub.f32 %v99, %v101
    %v103 = vmul.f32 %v102, %v102
    %v104 = vadd.f32 %v97, %v103
    %s105 = scalar_lea.vmem [#allocation2], 72
    %v106 = vld [vmem:[%s105] sm:$0xff]
    %s107 = scalar_lea.vmem [#allocation5], 72
    %v108 = vld [vmem:[%s107] sm:$0xff]
    %v109 = vsub.f32 %v106, %v108
    %v110 = vmul.f32 %v109, %v109
    %v111 = vadd.f32 %v104, %v110
    %s112 = scalar_lea.vmem [#allocation2], 80
    %v113 = vld [vmem:[%s112] sm:$0xff]
    %s114 = scalar_lea.vmem [#allocation5], 80
    %v115 = vld [vmem:[%s114] sm:$0xff]
    %v116 = vsub.f32 %v113, %v115
    %v117 = vmul.f32 %v116, %v116
    %v118 = vadd.f32 %v111, %v117
    %s119 = scalar_lea.vmem [#allocation2], 88
    %v120 = vld [vmem:[%s119] sm:$0xff]
    %s121 = scalar_lea.vmem [#allocation5], 88
    %v122 = vld [vmem:[%s121] sm:$0xff]
    %v123 = vsub.f32 %v120, %v122
    %v124 = vmul.f32 %v123, %v123
    %v125 = vadd.f32 %v118, %v124
    %s126 = scalar_lea.vmem [#allocation2], 96
    %v127 = vld [vmem:[%s126] sm:$0xff]
    %s128 = scalar_lea.vmem [#allocation5], 96
    %v129 = vld [vmem:[%s128] sm:$0xff]
    %v130 = vsub.f32 %v127, %v129
    %v131 = vmul.f32 %v130, %v130
    %v132 = vadd.f32 %v125, %v131
    %s133 = scalar_lea.vmem [#allocation2], 104
    %v134 = vld [vmem:[%s133] sm:$0xff]
    %s135 = scalar_lea.vmem [#allocation5], 104
    %v136 = vld [vmem:[%s135] sm:$0xff]
    %v137 = vsub.f32 %v134, %v136
    %v138 = vmul.f32 %v137, %v137
    %v139 = vadd.f32 %v132, %v138
    %s140 = scalar_lea.vmem [#allocation2], 112
    %v141 = vld [vmem:[%s140] sm:$0xff]
    %s142 = scalar_lea.vmem [#allocation5], 112
    %v143 = vld [vmem:[%s142] sm:$0xff]
    %v144 = vsub.f32 %v141, %v143
    %v145 = vmul.f32 %v144, %v144
    %v146 = vadd.f32 %v139, %v145
    %s147 = scalar_lea.vmem [#allocation2], 120
    %v148 = vld [vmem:[%s147] sm:$0xff]
    %s149 = scalar_lea.vmem [#allocation5], 120
    %v150 = vld [vmem:[%s149] sm:$0xff]
    %v151 = vsub.f32 %v148, %v150
    %v152 = vmul.f32 %v151, %v151
    %v153 = vadd.f32 %v146, %v152
    %s154 = scalar_lea.vmem [#allocation2], 128
    %v155 = vld [vmem:[%s154] sm:$0xff]
    %s156 = scalar_lea.vmem [#allocation5], 128
    %v157 = vld [vmem:[%s156] sm:$0xff]
    %v158 = vsub.f32 %v155, %v157
    %v159 = vmul.f32 %v158, %v158
    %v160 = vadd.f32 %v153, %v159
    %s161 = scalar_lea.vmem [#allocation2], 136
    %v162 = vld [vmem:[%s161] sm:$0xff]
    %s163 = scalar_lea.vmem [#allocation5], 136
    %v164 = vld [vmem:[%s163] sm:$0xff]
    %v165 = vsub.f32 %v162, %v164
    %v166 = vmul.f32 %v165, %v165
    %v167 = vadd.f32 %v160, %v166
    %s168 = scalar_lea.vmem [#allocation2], 144
    %v169 = vld [vmem:[%s168] sm:$0xff]
    %s170 = scalar_lea.vmem [#allocation5], 144
    %v171 = vld [vmem:[%s170] sm:$0xff]
    %v172 = vsub.f32 %v169, %v171
    %v173 = vmul.f32 %v172, %v172
    %v174 = vadd.f32 %v167, %v173
    %s175 = scalar_lea.vmem [#allocation2], 152
    %v176 = vld [vmem:[%s175] sm:$0xff]
    %s177 = scalar_lea.vmem [#allocation5], 152
    %v178 = vld [vmem:[%s177] sm:$0xff]
    %v179 = vsub.f32 %v176, %v178
    %v180 = vmul.f32 %v179, %v179
    %v181 = vadd.f32 %v174, %v180
    %s182 = scalar_lea.vmem [#allocation2], 160
    %v183 = vld [vmem:[%s182] sm:$0xff]
    %s184 = scalar_lea.vmem [#allocation5], 160
    %v185 = vld [vmem:[%s184] sm:$0xff]
    %v186 = vsub.f32 %v183, %v185
    %v187 = vmul.f32 %v186, %v186
    %v188 = vadd.f32 %v181, %v187
    %s189 = scalar_lea.vmem [#allocation2], 168
    %v190 = vld [vmem:[%s189] sm:$0xff]
    %s191 = scalar_lea.vmem [#allocation5], 168
    %v192 = vld [vmem:[%s191] sm:$0xff]
    %v193 = vsub.f32 %v190, %v192
    %v194 = vmul.f32 %v193, %v193
    %v195 = vadd.f32 %v188, %v194
    %s196 = scalar_lea.vmem [#allocation2], 176
    %v197 = vld [vmem:[%s196] sm:$0xff]
    %s198 = scalar_lea.vmem [#allocation5], 176
    %v199 = vld [vmem:[%s198] sm:$0xff]
    %v200 = vsub.f32 %v197, %v199
    %v201 = vmul.f32 %v200, %v200
    %v202 = vadd.f32 %v195, %v201
    %s203 = scalar_lea.vmem [#allocation2], 184
    %v204 = vld [vmem:[%s203] sm:$0xff]
    %s205 = scalar_lea.vmem [#allocation5], 184
    %v206 = vld [vmem:[%s205] sm:$0xff]
    %v207 = vsub.f32 %v204, %v206
    %v208 = vmul.f32 %v207, %v207
    %v209 = vadd.f32 %v202, %v208
    %s210 = scalar_lea.vmem [#allocation2], 192
    %v211 = vld [vmem:[%s210] sm:$0xff]
    %s212 = scalar_lea.vmem [#allocation5], 192
    %v213 = vld [vmem:[%s212] sm:$0xff]
    %v214 = vsub.f32 %v211, %v213
    %v215 = vmul.f32 %v214, %v214
    %v216 = vadd.f32 %v209, %v215
    %s217 = scalar_lea.vmem [#allocation2], 200
    %v218 = vld [vmem:[%s217] sm:$0xff]
    %s219 = scalar_lea.vmem [#allocation5], 200
    %v220 = vld [vmem:[%s219] sm:$0xff]
    %v221 = vsub.f32 %v218, %v220
    %v222 = vmul.f32 %v221, %v221
    %v223 = vadd.f32 %v216, %v222
    %s224 = scalar_lea.vmem [#allocation2], 208
    %v225 = vld [vmem:[%s224] sm:$0xff]
    %s226 = scalar_lea.vmem [#allocation5], 208
    %v227 = vld [vmem:[%s226] sm:$0xff]
    %v228 = vsub.f32 %v225, %v227
    %v229 = vmul.f32 %v228, %v228
    %v230 = vadd.f32 %v223, %v229
    %s231 = scalar_lea.vmem [#allocation2], 216
    %v232 = vld [vmem:[%s231] sm:$0xff]
    %s233 = scalar_lea.vmem [#allocation5], 216
    %v234 = vld [vmem:[%s233] sm:$0xff]
    %v235 = vsub.f32 %v232, %v234
    %v236 = vmul.f32 %v235, %v235
    %v237 = vadd.f32 %v230, %v236
    %s238 = scalar_lea.vmem [#allocation2], 224
    %v239 = vld [vmem:[%s238] sm:$0xff]
    %s240 = scalar_lea.vmem [#allocation5], 224
    %v241 = vld [vmem:[%s240] sm:$0xff]
    %v242 = vsub.f32 %v239, %v241
    %v243 = vmul.f32 %v242, %v242
    %v244 = vadd.f32 %v237, %v243
    %s245 = scalar_lea.vmem [#allocation2], 232
    %v246 = vld [vmem:[%s245] sm:$0xff]
    %s247 = scalar_lea.vmem [#allocation5], 232
    %v248 = vld [vmem:[%s247] sm:$0xff]
    %v249 = vsub.f32 %v246, %v248
    %v250 = vmul.f32 %v249, %v249
    %v251 = vadd.f32 %v244, %v250
    %s252 = scalar_lea.vmem [#allocation2], 240
    %v253 = vld [vmem:[%s252] sm:$0xff]
    %s254 = scalar_lea.vmem [#allocation5], 240
    %v255 = vld [vmem:[%s254] sm:$0xff]
    %v256 = vsub.f32 %v253, %v255
    %v257 = vmul.f32 %v256, %v256
    %v258 = vadd.f32 %v251, %v257
    %s259 = scalar_lea.vmem [#allocation2], 248
    %v260 = vld [vmem:[%s259] sm:$0xff]
    %s261 = scalar_lea.vmem [#allocation5], 248
    %v262 = vld [vmem:[%s261] sm:$0xff]
    %v263 = vsub.f32 %v260, %v262
    %v264 = vmul.f32 %v263, %v263
    %v265 = vadd.f32 %v258, %v264
    %v266 = vmax.f32 %v265, 1e-30
    %v267 = vlog2.pop %v266
    %v268 = vmul.f32 %v267, 0.6931472
    %v269 = vmul.f32 %v268, 0.8950609
    %v270 = vmul.f32 %v269, 1.442695
    %v271 = vpow.pop %v270
    %v272 = vmul.f32 %v271, 1.5769435
    %v273 = vadd.f32 %v272, 1.0
    %v274 = vrcp.pop %v273
    %v275 = vmul.f32 %v273, %v274
    %v276 = vsub.f32 1.0, %v275
    %v277 = vmul.f32 %v274, %v276
    %v278 = vadd.f32 %v274, %v277
    %vm279 = vweird.f32 %v273
    %vm280 = vweird.f32 %v274
    %vm281 = vmor %vm279, %vm280
    %v282 = vsel %vm281, %v274, %v278
    %v283 = vand.u32 2147483647, %v273
    %vm284 = vcmp.eq.f32.partialorder %v283, 8.507059e+37
    %v285 = vand.u32 %v273, 2147483648
    %v286 = vor.u32 1.1754944e-38, %v285
    %v287 = vsel %vm284, %v286, %v282
    %v288 = vmul.f32 1.0, %v287
    %s289 = smul.u32 0, 1024
    %v290 = vlaneseq
    %v291 = vshrl.u32 %v290, 7
    %v292 = vmul.u32 %v291, 128
    %v293 = vstv %s289
    %v294 = vadd.s32 %v293, %v292
    %v295 = vlaneseq
    %v296 = vand.u32 %v295, 127
    %v297 = vadd.s32 %v294, %v296
    %vm298 = vcmp.lt.s32.totalorder %v297, 8
    %vm299 = vcmp.lt.s32.totalorder %v297, 48
    %v300 = vmax.f32 %v288, 0.0001
    %v301 = vmin.f32 %v300, 1.0
    %v302 = vsub.f32 1.0, %v288
    %v303 = vmax.f32 %v302, 0.0001
    %v304 = vmin.f32 %v303, 1.0
    %v305 = vsel %vm298, %v301, %v304
    %v306 = vlog2.pop %v305
    %v307 = vmul.f32 %v306, 0.6931472
    %v308 = vmul.f32 %v307, -1.0
    %v309 = vsel %vm299, %v308, 0.0
    %310 = vst [vmem:[#allocation7] sm:$0xff] %v309
    // Predicated region
    $region18: #{tpu_custom_call.1} parent=1 // pred_check
      _
    $region19: #{tpu_custom_call.1} parent=1 // pred_check_branch
      %312 = sbr.rel (0) target = $region21
    $region20: #{tpu_custom_call.1} parent=1 // pred_region
      %314 = vsyncadd [#allocation4], 0
      %s316 = sshll.u32 [#allocation7], 4
      %s317 = int_to_ptr.vmem [resolvable:$true] %s316
      %s318 = sshll.u32 %s2, 4
      %s319 = int_to_ptr.hbm [resolvable:$true] %s318
      %321 = dma.vmem_to_hbm [thread:$0]  %s317, 128, %s319, [#allocation4]
    $region21: #{tpu_custom_call.1} parent=1 // pred_fallthru
      _
    // Predicated region
    $region22: #{tpu_custom_call.1} parent=1 // pred_check
      _
    $region23: #{tpu_custom_call.1} parent=1 // pred_check_branch
      %323 = sbr.rel (0) target = $region25
    $region24: #{tpu_custom_call.1} parent=1 // pred_region
      %325 = dma.done [#allocation4], 128
    $region25: #{tpu_custom_call.1} parent=1 // pred_fallthru
      _
    %326 = vsyncpa [#allocation3], 1
    %327 = vsyncpa [#allocation6], 1
    %328 = vsyncpa [#allocation4], 1

</llo_original>
